<compile_context>
chip_gen: v7x
topology: tpu7x:2x2x1
jax: 0.10.0
libtpu: 0.0.40
codegen_flags: <defaults>
</compile_context>

<pallas_src>
import jax
import jax.numpy as jnp
from jax.experimental import pallas as pl
from jax.experimental.pallas import tpu as pltpu


def _add_const_kernel(x_ref, o_ref):
    # ((x + 5) * 2 - 3) / 2 folds to x + 3.5 (exact fold; <=1 ulp vs the
    # literal op chain in any float dtype). Single VPU add — the kernel is
    # DMA/store-slot bound, so no extra in-kernel work or deeper buffering.
    o_ref[...] = (x_ref[...] + 3.5).astype(o_ref.dtype)


_TARGET_BLOCK_BYTES = 8 * 1024 * 1024   # ~8 MiB per block (amortizes grid-step cost on v7x)
_VMEM_LIMIT_BYTES = 40 * 1024 * 1024    # 2x(in+out) of 8 MiB blocks + headroom, < 64 MiB (v7x)
_MAX_LANE = 4096


def _xla_fallback(x):
    # Literal op chain: matches PyTorch semantics exactly, including integer
    # inputs promoting to float via true division. XLA fuses this in one pass.
    return ((x + 5) * 2 - 3) / 2


def pt_module_forward(x):
    """Pallas equivalent of PtModule.forward: ((x + 5) * 2 - 3) / 2."""
    total = x.size

    # Ragged sizes / non-float dtypes: a fused XLA expression is strictly
    # faster (and semantically exact) — do not pad+slice through the kernel.
    if total == 0 or total % 128 != 0 or not jnp.issubdtype(x.dtype, jnp.floating):
        return _xla_fallback(x)

    dtype = jnp.dtype(x.dtype)
    itemsize = dtype.itemsize

    # Widest lane-dense last dim: largest multiple of 128 (<= _MAX_LANE) that
    # divides the element count, so no wrapper-side padding is ever needed.
    lane = 128
    cap = (min(_MAX_LANE, total) // 128) * 128
    for cand in range(cap, 127, -128):
        if total % cand == 0:
            lane = cand
            break

    rows = total // lane
    x2d = x.reshape(rows, lane)  # contiguous reshape: free, no copy

    # Block sizing: ~8 MiB, sublane dim rounded to a dtype-aware multiple
    # (8 for f32, 16 for bf16/f16, 32 for 8-bit) to keep stores unmasked.
    sublane_mult = max(8, 32 // max(1, itemsize))
    block_rows = max(sublane_mult, _TARGET_BLOCK_BYTES // (lane * itemsize))
    block_rows -= block_rows % sublane_mult
    if block_rows >= rows:
        block_rows = rows            # single full-extent block (always legal)
        grid = 1
    else:
        grid = pl.cdiv(rows, block_rows)  # partial edge block is masked by Pallas

    def _call(dim_semantics):
        return pl.pallas_call(
            _add_const_kernel,
            out_shape=jax.ShapeDtypeStruct((rows, lane), x2d.dtype),
            grid_spec=pltpu.PrefetchScalarGridSpec(
                num_scalar_prefetch=0,
                grid=(grid,),
                in_specs=[pl.BlockSpec((block_rows, lane), lambda i: (i, 0))],
                out_specs=pl.BlockSpec((block_rows, lane), lambda i: (i, 0)),
            ),
            compiler_params=pltpu.CompilerParams(
                dimension_semantics=dim_semantics,
                vmem_limit_bytes=_VMEM_LIMIT_BYTES,
            ),
        )(x2d)

    # Prefer CORE_PARALLEL so v7x shards the stream across both TensorCores;
    # fall back to "parallel" if the chip/build rejects that semantic.
    core_parallel = getattr(pltpu, "CORE_PARALLEL", "parallel")
    try:
        out2d = _call((core_parallel,))
        jax.block_until_ready(out2d)
    except Exception:  # unsupported semantic on this chip/JAX build
        out2d = _call(("parallel",))

    return out2d.reshape(x.shape)  # free reshape, no copy


if __name__ == "__main__":
    key = jax.random.PRNGKey(0)
    # Small NCHW input consistent with the module (pure elementwise).
    x = jax.random.normal(key, (2, 4, 16, 16), dtype=jnp.float32)

    y = pt_module_forward(x)
    jax.block_until_ready(y)

    # Reference check against plain JAX semantics of the PyTorch forward.
    y_ref = ((x + 5.0) * 2.0 - 3.0) / 2.0
    assert y.shape == x.shape and y.dtype == y_ref.dtype
    assert jnp.allclose(y, y_ref, atol=1e-6), "mismatch vs reference"

    print("KERNEL_OK")
</pallas_src>

<mosaic_0001>
module attributes {stable_mosaic.version = 11 : i64} {
  func.func @_add_const_kernel(%arg0: i32, %arg1: memref<1x2048xf32, #tpu.memory_space<vmem>>, %arg2: memref<1x2048xf32, #tpu.memory_space<vmem>>) attributes {dimension_semantics = [#tpu.dimension_semantics<core_parallel>], iteration_bounds = array<i64: 1>, scalar_prefetch = 0 : i64, scratch_operands = 0 : i64, tpu.core_type = #tpu.core_type<tc>, window_params = [{transform_indices = @transform_0, window_bounds = array<i64: 1, 2048>}, {transform_indices = @transform_1, window_bounds = array<i64: 1, 2048>}]} {
    %c0 = arith.constant 0 : index
    %c0_0 = arith.constant 0 : index
    %0 = vector.load %arg1[%c0, %c0_0] : memref<1x2048xf32, #tpu.memory_space<vmem>>, vector<1x2048xf32>
    %cst = arith.constant 3.500000e+00 : f32
    %1 = vector.broadcast %cst : f32 to vector<1x2048xf32>
    %2 = arith.addf %0, %1 : vector<1x2048xf32>
    %c0_1 = arith.constant 0 : index
    %c0_2 = arith.constant 0 : index
    %3 = vector.load %arg2[%c0_1, %c0_2] : memref<1x2048xf32, #tpu.memory_space<vmem>>, vector<1x2048xf32>
    tpu.vector_store %arg2[%c0_1, %c0_2], %2 {strides = array<i32>} : memref<1x2048xf32, #tpu.memory_space<vmem>>, vector<1x2048xf32>,
    return
  }
  func.func @transform_0(%arg0: i32) -> (i32, i32) {
    %c0_i32 = arith.constant 0 : i32
    %c0_i32_0 = arith.constant 0 : i32
    return %arg0, %c0_i32 : i32, i32
  }
  func.func @transform_1(%arg0: i32) -> (i32, i32) {
    %c0_i32 = arith.constant 0 : i32
    %c0_i32_0 = arith.constant 0 : i32
    return %arg0, %c0_i32 : i32, i32
  }
}

module attributes {stable_mosaic.version = 11 : i64} {
  func.func @_add_const_kernel(%arg0: i32, %arg1: memref<1x2048xf32, #tpu.memory_space<vmem>>, %arg2: memref<1x2048xf32, #tpu.memory_space<vmem>>) attributes {dimension_semantics = [#tpu.dimension_semantics<parallel>], iteration_bounds = array<i64: 1>, scalar_prefetch = 0 : i64, scratch_operands = 0 : i64, tpu.core_type = #tpu.core_type<tc>, window_params = [{transform_indices = @transform_0, window_bounds = array<i64: 1, 2048>}, {transform_indices = @transform_1, window_bounds = array<i64: 1, 2048>}]} {
    %c0 = arith.constant 0 : index
    %c0_0 = arith.constant 0 : index
    %0 = vector.load %arg1[%c0, %c0_0] : memref<1x2048xf32, #tpu.memory_space<vmem>>, vector<1x2048xf32>
    %cst = arith.constant 3.500000e+00 : f32
    %1 = vector.broadcast %cst : f32 to vector<1x2048xf32>
    %2 = arith.addf %0, %1 : vector<1x2048xf32>
    %c0_1 = arith.constant 0 : index
    %c0_2 = arith.constant 0 : index
    %3 = vector.load %arg2[%c0_1, %c0_2] : memref<1x2048xf32, #tpu.memory_space<vmem>>, vector<1x2048xf32>
    tpu.vector_store %arg2[%c0_1, %c0_2], %2 {strides = array<i32>} : memref<1x2048xf32, #tpu.memory_space<vmem>>, vector<1x2048xf32>,
    return
  }
  func.func @transform_0(%arg0: i32) -> (i32, i32) {
    %c0_i32 = arith.constant 0 : i32
    %c0_i32_0 = arith.constant 0 : i32
    return %arg0, %c0_i32 : i32, i32
  }
  func.func @transform_1(%arg0: i32) -> (i32, i32) {
    %c0_i32 = arith.constant 0 : i32
    %c0_i32_0 = arith.constant 0 : i32
    return %arg0, %c0_i32 : i32, i32
  }
}

</mosaic_0001>

<llo_original>
// kernel: tpu_custom_call.1
$region0: #{tpu_custom_call.1}
  #allocation0 [shape = 'u32[]', space=smem, size = 0x4, offset = 0x4, fixed_abs, tag = 'smem constant byte address 0x4 - core index']
  #allocation1 [shape = 'u32[144,128]{1,0:T(1,128)}', space=vmem, size = 0x12000, scoped, tag = 'internal scratch']
  %s0 = inlined_call_operand.hbm [shape: f32[1,2048], index: 0, kind: input, shape index: {}]
  %s1 = inlined_call_operand.hbm [shape: f32[1,2048], index: 1, kind: output, shape index: {}]
  %s2 = sld [smem:[#allocation0]]
  $region18: #{tpu_custom_call.1} parent=0
    _
  %s4 = ssub.s32 1, %s2
  %s5 = scalar_select 0, %s4, %s2
  $region1: #{tpu_custom_call.1} parent=0
    #allocation2 [shape = 'u8[8192]{0}', space=vmem, size = 0x2000, scoped, tag = 'input window, operand 0, single buffered']
    #allocation3 [shape = 's32[1]{0}', space=sflag, size = 0x4, scoped, tag = 'scoped memory for tpu_custom_call.1']
    #allocation4 [shape = 's32[1]{0}', space=sflag, size = 0x4, scoped, tag = 'scoped memory for tpu_custom_call.1']
    #allocation5 [shape = 'u8[8192]{0}', space=vmem, size = 0x2000, scoped, tag = 'output window, operand 0, single buffered']
    %6 = vsyncpa [#allocation3], 0
    %7 = vsyncpa [#allocation4], 0
    // Predicated region
    $region2: #{tpu_custom_call.1} parent=1 // pred_check
      _
    $region3: #{tpu_custom_call.1} parent=1 // pred_check_branch
      %9 = sbr.rel (0) target = $region5
    $region4: #{tpu_custom_call.1} parent=1 // pred_region
      %s11 = ssub.s32 256, 256
      %12 = vsyncadd [#allocation3], %s11
      %s13 = smul.addr %s5, 16
      %s14 = smul.addr %s13, 16
      %s15 = scalar_lea.hbm %s0, %s14
      %s17 = sshll.u32 [#allocation2], 4
      %s18 = int_to_ptr.vmem [resolvable:$true] %s17
      %20 = dma.hbm_to_vmem [thread:$0]  %s15, 256, %s18, [#allocation3]
    $region5: #{tpu_custom_call.1} parent=1 // pred_fallthru
      _
    // Predicated region
    $region6: #{tpu_custom_call.1} parent=1 // pred_check
      _
    $region7: #{tpu_custom_call.1} parent=1 // pred_check_branch
      %22 = sbr.rel (0) target = $region9
    $region8: #{tpu_custom_call.1} parent=1 // pred_region
      %23 = dma.done [#allocation3], 256
    $region9: #{tpu_custom_call.1} parent=1 // pred_fallthru
      _
    %v24 = vld [vmem:[#allocation2] sm:$0xff]
    %v25 = vld [vmem:[#allocation2 + $0x8] sm:$0xff]
    %v26 = vadd.f32 %v24, 3.5
    %v27 = vadd.f32 %v25, 3.5
    %28 = vst [vmem:[#allocation5] sm:$0xff] %v26
    %29 = vst [vmem:[#allocation5 + $0x8] sm:$0xff] %v27
    // Predicated region
    $region10: #{tpu_custom_call.1} parent=1 // pred_check
      _
    $region11: #{tpu_custom_call.1} parent=1 // pred_check_branch
      %31 = sbr.rel (0) target = $region13
    $region12: #{tpu_custom_call.1} parent=1 // pred_region
      %s33 = ssub.s32 256, 256
      %34 = vsyncadd [#allocation4], %s33
      %s35 = smul.addr %s5, 16
      %s36 = smul.addr %s35, 16
      %s37 = scalar_lea.hbm %s1, %s36
      %s39 = sshll.u32 [#allocation5], 4
      %s40 = int_to_ptr.vmem [resolvable:$true] %s39
      %42 = dma.vmem_to_hbm [thread:$0]  %s40, 256, %s37, [#allocation4]
    $region13: #{tpu_custom_call.1} parent=1 // pred_fallthru
      _
    // Predicated region
    $region14: #{tpu_custom_call.1} parent=1 // pred_check
      _
    $region15: #{tpu_custom_call.1} parent=1 // pred_check_branch
      %44 = sbr.rel (0) target = $region17
    $region16: #{tpu_custom_call.1} parent=1 // pred_region
      %45 = dma.done [#allocation4], 256
    $region17: #{tpu_custom_call.1} parent=1 // pred_fallthru
      _
    %46 = vsyncpa [#allocation3], 1
    %47 = vsyncpa [#allocation4], 1

// kernel: tpu_custom_call.1
$region0: #{tpu_custom_call.1}
  #allocation0 [shape = 'u32[]', space=smem, size = 0x4, offset = 0x4, fixed_abs, tag = 'smem constant byte address 0x4 - core index']
  #allocation1 [shape = 'u32[144,128]{1,0:T(1,128)}', space=vmem, size = 0x12000, scoped, tag = 'internal scratch']
  %s0 = inlined_call_operand.hbm [shape: f32[1,2048], index: 0, kind: input, shape index: {}]
  %s1 = inlined_call_operand.hbm [shape: f32[1,2048], index: 1, kind: output, shape index: {}]
  %s2 = sld [smem:[#allocation0]]
  $region18: #{tpu_custom_call.1} parent=0
    _
  %s4 = ssub.s32 1, %s2
  %s5 = scalar_select 0, %s4, %s2
  $region1: #{tpu_custom_call.1} parent=0
    #allocation2 [shape = 'u8[8192]{0}', space=vmem, size = 0x2000, scoped, tag = 'input window, operand 0, single buffered']
    #allocation3 [shape = 's32[1]{0}', space=sflag, size = 0x4, scoped, tag = 'scoped memory for tpu_custom_call.1']
    #allocation4 [shape = 's32[1]{0}', space=sflag, size = 0x4, scoped, tag = 'scoped memory for tpu_custom_call.1']
    #allocation5 [shape = 'u8[8192]{0}', space=vmem, size = 0x2000, scoped, tag = 'output window, operand 0, single buffered']
    %6 = vsyncpa [#allocation3], 0
    %7 = vsyncpa [#allocation4], 0
    // Predicated region
    $region2: #{tpu_custom_call.1} parent=1 // pred_check
      _
    $region3: #{tpu_custom_call.1} parent=1 // pred_check_branch
      %9 = sbr.rel (0) target = $region5
    $region4: #{tpu_custom_call.1} parent=1 // pred_region
      %s11 = ssub.s32 256, 256
      %12 = vsyncadd [#allocation3], %s11
      %s14 = sshll.u32 [#allocation2], 4
      %s15 = int_to_ptr.vmem [resolvable:$true] %s14
      %17 = dma.hbm_to_vmem [thread:$0]  %s0, 256, %s15, [#allocation3]
    $region5: #{tpu_custom_call.1} parent=1 // pred_fallthru
      _
    // Predicated region
    $region6: #{tpu_custom_call.1} parent=1 // pred_check
      _
    $region7: #{tpu_custom_call.1} parent=1 // pred_check_branch
      %19 = sbr.rel (0) target = $region9
    $region8: #{tpu_custom_call.1} parent=1 // pred_region
      %20 = dma.done [#allocation3], 256
    $region9: #{tpu_custom_call.1} parent=1 // pred_fallthru
      _
    %v21 = vld [vmem:[#allocation2] sm:$0xff]
    %v22 = vld [vmem:[#allocation2 + $0x8] sm:$0xff]
    %v23 = vadd.f32 %v21, 3.5
    %v24 = vadd.f32 %v22, 3.5
    %25 = vst [vmem:[#allocation5] sm:$0xff] %v23
    %26 = vst [vmem:[#allocation5 + $0x8] sm:$0xff] %v24
    // Predicated region
    $region10: #{tpu_custom_call.1} parent=1 // pred_check
      _
    $region11: #{tpu_custom_call.1} parent=1 // pred_check_branch
      %28 = sbr.rel (0) target = $region13
    $region12: #{tpu_custom_call.1} parent=1 // pred_region
      %s30 = ssub.s32 256, 256
      %31 = vsyncadd [#allocation4], %s30
      %s33 = sshll.u32 [#allocation5], 4
      %s34 = int_to_ptr.vmem [resolvable:$true] %s33
      %36 = dma.vmem_to_hbm [thread:$0]  %s34, 256, %s1, [#allocation4]
    $region13: #{tpu_custom_call.1} parent=1 // pred_fallthru
      _
    // Predicated region
    $region14: #{tpu_custom_call.1} parent=1 // pred_check
      _
    $region15: #{tpu_custom_call.1} parent=1 // pred_check_branch
      %38 = sbr.rel (0) target = $region17
    $region16: #{tpu_custom_call.1} parent=1 // pred_region
      %39 = dma.done [#allocation4], 256
    $region17: #{tpu_custom_call.1} parent=1 // pred_fallthru
      _
    %40 = vsyncpa [#allocation3], 1
    %41 = vsyncpa [#allocation4], 1

</llo_original>
